<compile_context>
chip_gen: v6e
topology: v6e:2x2x1
jax: 0.10.0
libtpu: 0.0.40
codegen_flags: <defaults>
</compile_context>

<pallas_src>
import numpy as np
import jax
import jax.numpy as jnp
from jax.experimental import pallas as pl
from jax.experimental.pallas import tpu as pltpu


# ---------------------------------------------------------------------------
# Glue: replicate VCBLoss.__init__ / get_samples_per_cls deterministically.
# (v_type='mesh' path.)
# TODO(synk): 'mesh_336' / 'mesh_84' / 'joint' v_types need the external
#             regressor matrices (plain matmuls on the [V,2] table).
# ---------------------------------------------------------------------------
def get_samples_per_cls(all_contact_samples, total_epoch=10, total_sample_num=1000):
    acs = np.asarray(all_contact_samples)
    count_v_0 = (acs == 0).sum(axis=0)
    count_v_1 = (acs == 1).sum(axis=0)
    all_v_contact_counts = np.stack([count_v_0, count_v_1], axis=1).astype(np.float32)
    count_0 = float((acs == 0).sum())
    count_1 = float((acs == 1).sum())
    all_contact_counts = np.array([count_0, count_1], dtype=np.float32)

    denom_v = np.clip(all_v_contact_counts.sum(axis=1, keepdims=True), 1e-6, None)
    samples_per_cls_v = all_v_contact_counts / denom_v * total_sample_num
    denom = max(all_contact_counts.sum(), 1e-6)
    samples_per_cls = all_contact_counts / denom * total_sample_num

    samples_per_cls_v_dict = {}
    v_weight_max = 0.3
    for epoch in range(total_epoch):
        v_weight = v_weight_max * (epoch / (total_epoch - 1))
        all_weight = 1.0 - v_weight
        e = v_weight * samples_per_cls_v + all_weight * samples_per_cls[None, :]
        e = np.clip(e, 20.0, None)
        e = e / e.sum(axis=1, keepdims=True) * total_sample_num
        samples_per_cls_v_dict[epoch] = e.astype(np.float32)
    return samples_per_cls_v_dict


def compute_class_weight(samples_per_cls, beta):
    # samples_per_cls: [V, 2]
    effective_num = 1.0 - np.power(beta, samples_per_cls)
    class_weights = (1.0 - beta) / effective_num
    class_weights = class_weights / class_weights.sum(axis=1, keepdims=True)
    return class_weights.astype(np.float32)  # [V, 2]


# ---------------------------------------------------------------------------
# Pallas kernel
# ---------------------------------------------------------------------------
def _vcb_kernel(pred_ref, gt_ref, w_ref, out_ref):
    """One (tb, tv) tile -> lane-dense (tb, 128) partial sum.

    Per 128-lane chunk (so only ~10 vregs live at a time):
      c = gt==1 ? w1 * softplus(-x)                       # -w1*log(p)
                : w0 * softplus( x) + 0.5 * sigmoid(x)    # -w0*log(1-p) + fp-reg
    using the single-exp formulation e = exp(-|x|).
    """
    tb, tv = pred_ref.shape
    n_chunks = tv // 128
    n_acc = min(4, n_chunks)              # rotating accumulators break the add chain
    accs = [jnp.zeros((tb, 128), jnp.float32) for _ in range(n_acc)]

    for i in range(n_chunks):
        sl = slice(i * 128, (i + 1) * 128)
        x = pred_ref[:, sl].astype(jnp.float32)      # logits chunk      [tb, 128]
        g1 = gt_ref[:, sl] > 0.5                     # class-1 mask      [tb, 128]
        w0 = w_ref[0:1, sl]                          # class-0 weight    [1, 128]
        w1 = w_ref[1:2, sl]                          # class-1 weight    [1, 128]

        e = jnp.exp(-jnp.abs(x))                     # one EUP exp / element
        sp_pos = jnp.maximum(x, 0.0) + jnp.log1p(e)  # softplus(x)  = -log(1-p)
        sp_neg = sp_pos - x                          # softplus(-x) = -log(p)
        r = pl.reciprocal(1.0 + e, approx=True)      # EUP vrcp (nearly free)
        p = jnp.where(x >= 0.0, r, e * r)            # sigmoid(x)

        c = jnp.where(g1, w1 * sp_neg, w0 * sp_pos + 0.5 * p)
        accs[i % n_acc] = accs[i % n_acc] + c

    total = accs[0]
    for a in accs[1:]:
        total = total + a
    out_ref[...] = total                             # lane-dense (tb, 128) store


# ---------------------------------------------------------------------------
# Tiling
# ---------------------------------------------------------------------------
_SUBLANE = 16          # bf16 sublane packing
_TB_MAX = 256          # batch tile
_TV_MAX = 8192         # vertex tile cap
_VMEM_INPUT_BUDGET = 20 << 20   # double-buffered input blocks


def _round_up(x, m):
    return (x + m - 1) // m * m


def _cdiv(a, b):
    return -(-a // b)


def _choose_tiling(B, V):
    Bp = _round_up(max(B, _SUBLANE), _SUBLANE)
    tb = min(Bp, _TB_MAX)
    Bp = _round_up(Bp, tb)
    grid_b = Bp // tb

    v128 = _round_up(V, 128)
    # Double-buffered per-column bytes: pred bf16 + gt bf16 + weight rows (2 x f32).
    bytes_per_col = 2 * (tb * 2 + tb * 2 + 2 * 4)
    tv_cap = max(128, min(_TV_MAX,
                          (_VMEM_INPUT_BUDGET // bytes_per_col) // 128 * 128))
    if v128 <= tv_cap:
        grid_v, tv = 1, v128
    else:
        grid_v = _cdiv(v128, tv_cap)
        tv = _round_up(_cdiv(v128, grid_v), 128)

    # Megacore (v7x): guarantee >= 2 grid steps when there is enough work,
    # otherwise the "parallel" axes leave a TensorCore idle.
    if grid_b * grid_v == 1 and v128 >= 256:
        grid_v = 2
        tv = _round_up(_cdiv(v128, 2), 128)

    Vp = grid_v * tv
    return Bp, tb, grid_b, Vp, tv, grid_v


# ---------------------------------------------------------------------------
# Wrapper
# ---------------------------------------------------------------------------
def vcb_loss_pallas(pred, gt, class_weights, *, compute_dtype=jnp.bfloat16):
    """pred, gt: [B, V] (pred = raw logits, like the PyTorch module input).
    class_weights: [V, 2] float32.  Returns scalar loss (valid=None path)."""
    B, V = pred.shape
    n_real = float(B * V)
    Bp, tb, grid_b, Vp, tv, grid_v = _choose_tiling(B, V)

    # Merged weight table, zero-padded on the vertex axis (padded cols -> 0).
    cw = np.asarray(class_weights, dtype=np.float32)
    w = np.zeros((2, Vp), np.float32)
    w[0, :V] = cw[:, 0]
    w[1, :V] = cw[:, 1]
    w = jnp.asarray(w)

    # pred/gt travel as bf16 (labels {0,1} are exact in bf16); f32 math in-kernel.
    pred_a = jnp.asarray(pred).astype(compute_dtype)
    gt_a = jnp.asarray(gt).astype(compute_dtype)
    if (Bp != B) or (Vp != V):
        # Large finite negative sentinel + label 0 => exactly zero contribution.
        pred_a = jnp.pad(pred_a, ((0, Bp - B), (0, Vp - V)), constant_values=-1e9)
        gt_a = jnp.pad(gt_a, ((0, Bp - B), (0, Vp - V)), constant_values=0)

    partials = pl.pallas_call(
        _vcb_kernel,
        out_shape=jax.ShapeDtypeStruct((Bp, grid_v * 128), jnp.float32),
        grid_spec=pltpu.PrefetchScalarGridSpec(
            num_scalar_prefetch=0,
            grid=(grid_b, grid_v),
            in_specs=[pl.BlockSpec((tb, tv), lambda i, j: (i, j)),
                      pl.BlockSpec((tb, tv), lambda i, j: (i, j)),
                      pl.BlockSpec((2, tv), lambda i, j: (0, j))],
            out_specs=pl.BlockSpec((tb, 128), lambda i, j: (i, j)),
        ),
        compiler_params=pltpu.CompilerParams(
            dimension_semantics=("parallel", "parallel"),
            vmem_limit_bytes=32 << 20),
    )(pred_a, gt_a, w)

    # Tiny final reduction outside the kernel; divide by the *real* B*V.
    return jnp.sum(partials) / n_real


# TODO(synk): `valid` row-filtering (dynamic boolean indexing) has no clean
#             static-shape Pallas equivalent; only the valid=None path is
#             implemented (a per-row mask input could emulate it if needed).


def vcb_loss_reference(pred, gt, class_weights):
    """Pure-JAX reference matching the PyTorch forward (valid=None)."""
    gt = gt.astype(jnp.float32)
    p = jax.nn.sigmoid(pred.astype(jnp.float32))
    bce = -(gt * jnp.log(p) + (1.0 - gt) * jnp.log(1.0 - p))
    cw = jnp.asarray(class_weights)                      # [V, 2]
    w = jnp.where(gt == 1.0, cw[None, :, 1], cw[None, :, 0])
    vcb = jnp.mean(bce * w)
    fp = jnp.mean((gt == 0.0).astype(jnp.float32) * p)
    return vcb + 0.5 * fp


if __name__ == "__main__":
    key = jax.random.PRNGKey(0)

    def run_case(subkey, B, V, n_samples=64, beta=0.9999, total_epoch=10, epoch=3):
        k1, k2, k3 = jax.random.split(subkey, 3)
        # synthetic contact dataset (stands in for cfg.MODEL.contact_data_path)
        acs = np.asarray(jax.random.uniform(k1, (n_samples, V)) < 0.3).astype(np.int32)
        spc_dict = get_samples_per_cls(acs, total_epoch=total_epoch)
        e = epoch if epoch in spc_dict else max(spc_dict)
        class_weights = compute_class_weight(spc_dict[e], beta)     # [V, 2]

        pred = jax.random.normal(k2, (B, V), dtype=jnp.float32)     # logits
        gt = (jax.random.uniform(k3, (B, V)) < 0.3).astype(jnp.float32)

        loss = jax.block_until_ready(vcb_loss_pallas(pred, gt, class_weights))
        ref = jax.block_until_ready(vcb_loss_reference(pred, gt, class_weights))
        # bf16 input stream + approx reciprocal => modest tolerance on the mean.
        np.testing.assert_allclose(np.asarray(loss), np.asarray(ref),
                                   rtol=1e-2, atol=2e-4)

    k_a, k_b, k_c = jax.random.split(key, 3)
    run_case(k_a, B=8, V=256)    # aligned shapes; grid split to 2 steps (megacore path)
    run_case(k_b, B=5, V=200)    # batch + vertex zero-cost padding
    run_case(k_c, B=4, V=120)    # tiny single-step grid

    print("KERNEL_OK")
</pallas_src>

<mosaic_0001>
module attributes {stable_mosaic.version = 11 : i64} {
  func.func @_vcb_kernel(%arg0: i32, %arg1: i32, %arg2: memref<16x128xbf16, #tpu.memory_space<vmem>>, %arg3: memref<16x128xbf16, #tpu.memory_space<vmem>>, %arg4: memref<2x128xf32, #tpu.memory_space<vmem>>, %arg5: memref<16x128xf32, #tpu.memory_space<vmem>>) attributes {dimension_semantics = [#tpu.dimension_semantics<parallel>, #tpu.dimension_semantics<parallel>], iteration_bounds = array<i64: 1, 2>, scalar_prefetch = 0 : i64, scratch_operands = 0 : i64, tpu.core_type = #tpu.core_type<tc>, window_params = [{transform_indices = @transform_0, window_bounds = array<i64: 16, 128>}, {transform_indices = @transform_1, window_bounds = array<i64: 16, 128>}, {transform_indices = @transform_2, window_bounds = array<i64: 2, 128>}, {transform_indices = @transform_3, window_bounds = array<i64: 16, 128>}]} {
    %cst = arith.constant 0.000000e+00 : f32
    %0 = vector.broadcast %cst : f32 to vector<16x128xf32>
    %c0 = arith.constant 0 : index
    %c0_0 = arith.constant 0 : index
    %1 = vector.load %arg2[%c0, %c0_0] : memref<16x128xbf16, #tpu.memory_space<vmem>>, vector<16x128xbf16>
    %2 = arith.extf %1 : vector<16x128xbf16> to vector<16x128xf32>
    %c0_1 = arith.constant 0 : index
    %c0_2 = arith.constant 0 : index
    %3 = vector.load %arg3[%c0_1, %c0_2] : memref<16x128xbf16, #tpu.memory_space<vmem>>, vector<16x128xbf16>
    %cst_3 = arith.constant 5.000000e-01 : bf16
    %4 = vector.broadcast %cst_3 : bf16 to vector<16x128xbf16>
    %5 = arith.cmpf ogt, %3, %4 : vector<16x128xbf16>
    %c0_4 = arith.constant 0 : index
    %c0_5 = arith.constant 0 : index
    %6 = vector.load %arg4[%c0_4, %c0_5] : memref<2x128xf32, #tpu.memory_space<vmem>>, vector<1x128xf32>
    %c1 = arith.constant 1 : index
    %c0_6 = arith.constant 0 : index
    %7 = vector.load %arg4[%c1, %c0_6] : memref<2x128xf32, #tpu.memory_space<vmem>>, vector<1x128xf32>
    %8 = math.absf %2 : vector<16x128xf32>
    %cst_7 = arith.constant 0.000000e+00 : f32
    %9 = vector.broadcast %cst_7 : f32 to vector<16x128xf32>
    %10 = arith.subf %9, %8 : vector<16x128xf32>
    %11 = math.exp %10 : vector<16x128xf32>
    %cst_8 = arith.constant 0.000000e+00 : f32
    %12 = vector.broadcast %cst_8 : f32 to vector<16x128xf32>
    %13 = arith.maximumf %2, %12 : vector<16x128xf32>
    %14 = math.log1p %11 : vector<16x128xf32>
    %15 = arith.addf %13, %14 : vector<16x128xf32>
    %16 = arith.subf %15, %2 : vector<16x128xf32>
    %cst_9 = arith.constant 1.000000e+00 : f32
    %17 = vector.broadcast %cst_9 : f32 to vector<16x128xf32>
    %18 = arith.addf %17, %11 : vector<16x128xf32>
    %19 = tpu.reciprocal %18 {approx = true} : vector<16x128xf32> -> vector<16x128xf32>
    %cst_10 = arith.constant 0.000000e+00 : f32
    %20 = vector.broadcast %cst_10 : f32 to vector<16x128xf32>
    %21 = arith.cmpf oge, %2, %20 : vector<16x128xf32>
    %22 = arith.mulf %11, %19 : vector<16x128xf32>
    %23 = arith.select %21, %19, %22 : vector<16x128xi1>, vector<16x128xf32>
    %24 = vector.broadcast %7 : vector<1x128xf32> to vector<16x128xf32>
    %25 = arith.mulf %24, %16 : vector<16x128xf32>
    %26 = vector.broadcast %6 : vector<1x128xf32> to vector<16x128xf32>
    %27 = arith.mulf %26, %15 : vector<16x128xf32>
    %cst_11 = arith.constant 5.000000e-01 : f32
    %28 = vector.broadcast %cst_11 : f32 to vector<16x128xf32>
    %29 = arith.mulf %28, %23 : vector<16x128xf32>
    %30 = arith.addf %27, %29 : vector<16x128xf32>
    %31 = arith.select %5, %25, %30 : vector<16x128xi1>, vector<16x128xf32>
    %32 = arith.addf %0, %31 : vector<16x128xf32>
    %c0_12 = arith.constant 0 : index
    %c0_13 = arith.constant 0 : index
    %33 = vector.load %arg5[%c0_12, %c0_13] : memref<16x128xf32, #tpu.memory_space<vmem>>, vector<16x128xf32>
    tpu.vector_store %arg5[%c0_12, %c0_13], %32 {strides = array<i32>} : memref<16x128xf32, #tpu.memory_space<vmem>>, vector<16x128xf32>,
    return
  }
  func.func @transform_0(%arg0: i32, %arg1: i32) -> (i32, i32) {
    %c0_i32 = arith.constant 0 : i32
    return %arg0, %arg1 : i32, i32
  }
  func.func @transform_1(%arg0: i32, %arg1: i32) -> (i32, i32) {
    %c0_i32 = arith.constant 0 : i32
    return %arg0, %arg1 : i32, i32
  }
  func.func @transform_2(%arg0: i32, %arg1: i32) -> (i32, i32) {
    %c0_i32 = arith.constant 0 : i32
    %c0_i32_0 = arith.constant 0 : i32
    return %c0_i32, %arg1 : i32, i32
  }
  func.func @transform_3(%arg0: i32, %arg1: i32) -> (i32, i32) {
    %c0_i32 = arith.constant 0 : i32
    return %arg0, %arg1 : i32, i32
  }
}

</mosaic_0001>

<llo_original>
// kernel: tpu_custom_call.1
$region0: #{tpu_custom_call.1}
  #allocation0 [shape = 'u32[]', space=smem, size = 0x4, offset = 0x4, fixed_abs, tag = 'smem constant byte address 0x4 - core index']
  #allocation1 [shape = 'u32[144,128]{1,0:T(1,128)}', space=vmem, size = 0x12000, scoped, tag = 'internal scratch']
  %s0 = inlined_call_operand.hbm [shape: bf16[16,256], index: 0, kind: input, shape index: {}]
  %s1 = inlined_call_operand.hbm [shape: bf16[16,256], index: 1, kind: input, shape index: {}]
  %s2 = inlined_call_operand.hbm [shape: f32[2,256], index: 2, kind: input, shape index: {}]
  %s3 = inlined_call_operand.hbm [shape: f32[16,256], index: 3, kind: output, shape index: {}]
  %s4 = sld [smem:[#allocation0]]
  $region57: #{tpu_custom_call.1} parent=0
    _
  %s6 = ssub.s32 1, %s4
  %s7 = scalar_select 0, %s6, %s4
  $region1: #{tpu_custom_call.1} parent=0
    #allocation2 [shape = 'u8[8192]{0}', space=vmem, size = 0x2000, scoped, tag = 'input window, operand 0']
    #allocation3 [shape = 's32[2]{0}', space=sflag, size = 0x8, scoped, tag = 'scoped memory for tpu_custom_call.1']
    #allocation4 [shape = 's32[2]{0}', space=sflag, size = 0x8, scoped, tag = 'scoped memory for tpu_custom_call.1']
    #allocation5 [shape = 'u8[8192]{0}', space=vmem, size = 0x2000, scoped, tag = 'input window, operand 1']
    #allocation6 [shape = 's32[2]{0}', space=sflag, size = 0x8, scoped, tag = 'scoped memory for tpu_custom_call.1']
    #allocation7 [shape = 'u8[2048]{0}', space=vmem, size = 0x800, scoped, tag = 'input window, operand 2']
    #allocation8 [shape = 'u8[16384]{0}', space=vmem, size = 0x4000, scoped, tag = 'output window, operand 0']
    %8 = vsyncpa [#allocation3], 0
    %s9 = scalar_lea.sflag [#allocation3], 1
    %10 = vsyncpa %s9, 0
    %11 = vsyncpa [#allocation6], 0
    %s12 = scalar_lea.sflag [#allocation6], 1
    %13 = vsyncpa %s12, 0
    %14 = vsyncpa [#allocation4], 0
    %s15 = scalar_lea.sflag [#allocation4], 1
    %16 = vsyncpa %s15, 0
    loop: start=0, step=1, limit=4
    $region2: #{tpu_custom_call.1} parent=1 // loop_pre_header
      _
    $region3: #{tpu_custom_call.1} parent=1 // loop_header
      %s18 = sphi 0, %s22
      %p19 = scmp.ge.s32.totalorder %s18, 4
      %s25 = sphi 0, %s37
      %s26 = sphi 0, %s33
      %s27 = sphi 0, %s25
      %s28 = sphi 0, %s26
      %s29 = sphi 0, %s27
      %s30 = sphi 0, %s28
      %s42 = sphi 0, %s44
      %s45 = sphi 0, %s42
      %s46 = sphi 0, %s45
      %s62 = sphi 0, %s46
      %s70 = sphi 0, %s72
      %s73 = sphi 0, %s70
      %s74 = sphi 0, %s73
      %s90 = sphi 0, %s74
      %s96 = sphi 0, %s98
      %s99 = sphi 0, %s96
      %s100 = sphi 0, %s99
      %s116 = sphi 0, %s100
      %s124 = sphi 0, %s126
      %s127 = sphi 0, %s124
      %s128 = sphi 0, %s127
      %s144 = sphi 0, %s128
    $region4: #{tpu_custom_call.1} parent=1 // loop_header_branch
      %21 = sbr.rel (%p19) target = $region8
    $region5: #{tpu_custom_call.1} parent=1 // loop_body
      %s23 = ssub.s32 %s18, 1
      %s24 = ssub.s32 %s18, 2
      %s31 = sadd.s32 1, %s26
      %p32 = scmp.ge.s32.totalorder %s31, 2
      %s33 = scalar_select %p32, 0, %s31
      %s34 = sadd.s32 1, %s25
      %s35 = scalar_select %p32, %s34, %s25
      %p36 = scmp.ge.s32.totalorder %s35, 1
      %s37 = scalar_select %p36, 0, %s35
      %s38 = ssub.s32 %s25, %s37
      %s39 = ssub.s32 %s26, %s33
      %s40 = sor.u32 %s38, %s39
      %p41 = scmp.eq.s32.totalorder %s40, 0
      %s43 = sadd.s32 %s42, 1
      %s44 = scalar_select %p41, %s42, %s43
      %p47 = pneg %p41
      %p48 = scmp.eq.s32.totalorder %s18, 1
      %p49 = por %p47, %p48
      %p50 = scmp.ne.s32.totalorder %s42, %s45
      %p51 = scmp.eq.s32.totalorder %s18, 0
      %p52 = por %p50, %p51
      %p53 = scmp.ne.s32.totalorder %s42, %s45
      %p54 = scmp.eq.s32.totalorder %s23, 1
      %p55 = por %p53, %p54
      %p56 = scmp.ne.s32.totalorder %s45, %s46
      %p57 = scmp.eq.s32.totalorder %s23, 0
      %p58 = por %p56, %p57
      %p59 = scmp.ne.s32.totalorder %s45, %s46
      %p60 = scmp.eq.s32.totalorder %s24, 1
      %p61 = por %p59, %p60
      %p63 = scmp.ne.s32.totalorder %s46, %s62
      %p64 = scmp.eq.s32.totalorder %s24, 0
      %p65 = por %p63, %p64
      %s66 = ssub.s32 %s25, %s37
      %s67 = ssub.s32 %s26, %s33
      %s68 = sor.u32 %s66, %s67
      %p69 = scmp.eq.s32.totalorder %s68, 0
      %s71 = sadd.s32 %s70, 1
      %s72 = scalar_select %p69, %s70, %s71
      %p75 = pneg %p69
      %p76 = scmp.eq.s32.totalorder %s18, 1
      %p77 = por %p75, %p76
      %p78 = scmp.ne.s32.totalorder %s70, %s73
      %p79 = scmp.eq.s32.totalorder %s18, 0
      %p80 = por %p78, %p79
      %p81 = scmp.ne.s32.totalorder %s70, %s73
      %p82 = scmp.eq.s32.totalorder %s23, 1
      %p83 = por %p81, %p82
      %p84 = scmp.ne.s32.totalorder %s73, %s74
      %p85 = scmp.eq.s32.totalorder %s23, 0
      %p86 = por %p84, %p85
      %p87 = scmp.ne.s32.totalorder %s73, %s74
      %p88 = scmp.eq.s32.totalorder %s24, 1
      %p89 = por %p87, %p88
      %p91 = scmp.ne.s32.totalorder %s74, %s90
      %p92 = scmp.eq.s32.totalorder %s24, 0
      %p93 = por %p91, %p92
      %s94 = ssub.s32 %s26, %s33
      %p95 = scmp.eq.s32.totalorder %s94, 0
      %s97 = sadd.s32 %s96, 1
      %s98 = scalar_select %p95, %s96, %s97
      %p101 = pneg %p95
      %p102 = scmp.eq.s32.totalorder %s18, 1
      %p103 = por %p101, %p102
      %p104 = scmp.ne.s32.totalorder %s96, %s99
      %p105 = scmp.eq.s32.totalorder %s18, 0
      %p106 = por %p104, %p105
      %p107 = scmp.ne.s32.totalorder %s96, %s99
      %p108 = scmp.eq.s32.totalorder %s23, 1
      %p109 = por %p107, %p108
      %p110 = scmp.ne.s32.totalorder %s99, %s100
      %p111 = scmp.eq.s32.totalorder %s23, 0
      %p112 = por %p110, %p111
      %p113 = scmp.ne.s32.totalorder %s99, %s100
      %p114 = scmp.eq.s32.totalorder %s24, 1
      %p115 = por %p113, %p114
      %p117 = scmp.ne.s32.totalorder %s100, %s116
      %p118 = scmp.eq.s32.totalorder %s24, 0
      %p119 = por %p117, %p118
      %s120 = ssub.s32 %s25, %s37
      %s121 = ssub.s32 %s26, %s33
      %s122 = sor.u32 %s120, %s121
      %p123 = scmp.eq.s32.totalorder %s122, 0
      %s125 = sadd.s32 %s124, 1
      %s126 = scalar_select %p123, %s124, %s125
      %p129 = pneg %p123
      %p130 = scmp.eq.s32.totalorder %s18, 1
      %p131 = por %p129, %p130
      %p132 = scmp.ne.s32.totalorder %s124, %s127
      %p133 = scmp.eq.s32.totalorder %s18, 0
      %p134 = por %p132, %p133
      %p135 = scmp.ne.s32.totalorder %s124, %s127
      %p136 = scmp.eq.s32.totalorder %s23, 1
      %p137 = por %p135, %p136
      %p138 = scmp.ne.s32.totalorder %s127, %s128
      %p139 = scmp.eq.s32.totalorder %s23, 0
      %p140 = por %p138, %p139
      %p141 = scmp.ne.s32.totalorder %s127, %s128
      %p142 = scmp.eq.s32.totalorder %s24, 1
      %p143 = por %p141, %p142
      %p145 = scmp.ne.s32.totalorder %s128, %s144
      %p146 = scmp.eq.s32.totalorder %s24, 0
      %p147 = por %p145, %p146
      %p148 = scmp.le.s32.totalorder 1, %s18
      %p149 = scmp.lt.s32.totalorder %s18, 3
      %p150 = pnand %p148, %p149
      %p151 = pneg %p150
      // Predicated region
      $region9: #{tpu_custom_call.1} parent=5 // pred_check
        _
      $region10: #{tpu_custom_call.1} parent=5 // pred_check_branch
        %153 = sbr.rel (%p150) target = $region12
      $region11: #{tpu_custom_call.1} parent=5 // pred_region
        %s154 = ssub.s32 %s18, 1
      $region12: #{tpu_custom_call.1} parent=5 // pred_fallthru
        _
      %p155 = scmp.lt.s32.totalorder %s18, 2
      // Predicated region
      $region13: #{tpu_custom_call.1} parent=5 // pred_check
        %p156 = pneg %p155
      $region14: #{tpu_custom_call.1} parent=5 // pred_check_branch
        %158 = sbr.rel (%p156) target = $region16
      $region15: #{tpu_custom_call.1} parent=5 // pred_region
        // Predicated region
        $region17: #{tpu_custom_call.1} parent=15 // pred_check
          %p159 = pneg %p52
        $region18: #{tpu_custom_call.1} parent=15 // pred_check_branch
          %161 = sbr.rel (%p159) target = $region20
        $region19: #{tpu_custom_call.1} parent=15 // pred_region
          %s162 = sand.u32 %s42, 1
          %s163 = scalar_lea.sflag [#allocation3], %s162
          %s164 = sand.u32 %s42, 1
          %s165 = smul.addr %s164, 8
          %s166 = scalar_lea.vmem [#allocation2], %s165
          %s167 = smul.u32 2, %s25
          %s169 = ssub.s32 128, 128
          %170 = vsyncadd %s163, %s169
          %s171 = smul.addr %s167, 2
          %s172 = sadd.s32 %s26, %s171
          %s173 = smul.addr %s172, 64
          %s174 = scalar_lea.hbm %s0, %s173
          %s175 = sshll.u32 %s166, 4
          %s176 = int_to_ptr.vmem [resolvable:$true] %s175
          %181 = dma.hbm_to_vmem [thread:$0]  %s174, 128, %s176, %s163, 128, 64, 4
        $region20: #{tpu_custom_call.1} parent=15 // pred_fallthru
          _
        // Predicated region
        $region21: #{tpu_custom_call.1} parent=15 // pred_check
          %p182 = pneg %p80
        $region22: #{tpu_custom_call.1} parent=15 // pred_check_branch
          %184 = sbr.rel (%p182) target = $region24
        $region23: #{tpu_custom_call.1} parent=15 // pred_region
          %s185 = sand.u32 %s18, 1
          %s186 = scalar_lea.sflag [#allocation6], %s185
          %s187 = sand.u32 %s70, 1
          %s188 = smul.addr %s187, 8
          %s189 = scalar_lea.vmem [#allocation5], %s188
          %s190 = smul.u32 2, %s25
          %s192 = ssub.s32 128, 128
          %193 = vsyncadd %s186, %s192
          %s194 = smul.addr %s190, 2
          %s195 = sadd.s32 %s26, %s194
          %s196 = smul.addr %s195, 64
          %s197 = scalar_lea.hbm %s1, %s196
          %s198 = sshll.u32 %s189, 4
          %s199 = int_to_ptr.vmem [resolvable:$true] %s198
          %204 = dma.hbm_to_vmem [thread:$0]  %s197, 128, %s199, %s186, 128, 64, 4
        $region24: #{tpu_custom_call.1} parent=15 // pred_fallthru
          _
        // Predicated region
        $region25: #{tpu_custom_call.1} parent=15 // pred_check
          %p205 = pneg %p106
        $region26: #{tpu_custom_call.1} parent=15 // pred_check_branch
          %207 = sbr.rel (%p205) target = $region28
        $region27: #{tpu_custom_call.1} parent=15 // pred_region
          %s208 = sand.u32 %s18, 1
          %s209 = scalar_lea.sflag [#allocation6], %s208
          %s210 = sand.u32 %s96, 1
          %s211 = smul.addr %s210, 2
          %s212 = scalar_lea.vmem [#allocation7], %s211
          %s214 = ssub.s32 32, 32
          %215 = vsyncadd %s209, %s214
          %s216 = smul.addr %s26, 32
          %s217 = scalar_lea.hbm %s2, %s216
          %s219 = sshll.u32 %s212, 4
          %s220 = int_to_ptr.vmem [resolvable:$true] %s219
          %222 = dma.hbm_to_vmem [thread:$0]  %s217, 32, %s220, %s209
        $region28: #{tpu_custom_call.1} parent=15 // pred_fallthru
          _
      $region16: #{tpu_custom_call.1} parent=5 // pred_fallthru
        _
      %p223 = scmp.le.s32.totalorder 1, %s18
      %p224 = scmp.lt.s32.totalorder %s18, 3
      %p225 = pnand %p223, %p224
      %p226 = pneg %p225
      // Predicated region
      $region29: #{tpu_custom_call.1} parent=5 // pred_check
        _
      $region30: #{tpu_custom_call.1} parent=5 // pred_check_branch
        %228 = sbr.rel (%p225) target = $region32
      $region31: #{tpu_custom_call.1} parent=5 // pred_region
        %s229 = ssub.s32 %s18, 1
        %s230 = sand.u32 %s45, 1
        %s231 = scalar_lea.sflag [#allocation3], %s230
        %s232 = sand.u32 %s45, 1
        %s233 = smul.addr %s232, 8
        %s234 = scalar_lea.vmem [#allocation2], %s233
        // Predicated region
        $region33: #{tpu_custom_call.1} parent=31 // pred_check
          %p235 = pneg %p58
        $region34: #{tpu_custom_call.1} parent=31 // pred_check_branch
          %237 = sbr.rel (%p235) target = $region36
        $region35: #{tpu_custom_call.1} parent=31 // pred_region
          %238 = dma.done %s231, 128
        $region36: #{tpu_custom_call.1} parent=31 // pred_fallthru
          _
        %s239 = sand.u32 %s23, 1
        %s240 = scalar_lea.sflag [#allocation6], %s239
        %s241 = sand.u32 %s73, 1
        %s242 = smul.addr %s241, 8
        %s243 = scalar_lea.vmem [#allocation5], %s242
        // Predicated region
        $region37: #{tpu_custom_call.1} parent=31 // pred_check
          %p244 = pneg %p86
        $region38: #{tpu_custom_call.1} parent=31 // pred_check_branch
          %246 = sbr.rel (%p244) target = $region40
        $region39: #{tpu_custom_call.1} parent=31 // pred_region
          %247 = dma.done %s240, 128
        $region40: #{tpu_custom_call.1} parent=31 // pred_fallthru
          _
        %s248 = sand.u32 %s23, 1
        %s249 = scalar_lea.sflag [#allocation6], %s248
        %s250 = sand.u32 %s99, 1
        %s251 = smul.addr %s250, 2
        %s252 = scalar_lea.vmem [#allocation7], %s251
        // Predicated region
        $region41: #{tpu_custom_call.1} parent=31 // pred_check
          %p253 = pneg %p112
        $region42: #{tpu_custom_call.1} parent=31 // pred_check_branch
          %255 = sbr.rel (%p253) target = $region44
        $region43: #{tpu_custom_call.1} parent=31 // pred_region
          %256 = dma.done %s249, 32
        $region44: #{tpu_custom_call.1} parent=31 // pred_fallthru
          _
        %s257 = sand.u32 %s45, 1
        %s258 = scalar_lea.sflag [#allocation3], %s257
        %s259 = sand.u32 %s45, 1
        %s260 = smul.addr %s259, 8
        %s261 = scalar_lea.vmem [#allocation2], %s260
        %p262 = pneg %p58
        %p263 = pneg %p55
        %s264 = sand.u32 %s23, 1
        %s265 = scalar_lea.sflag [#allocation6], %s264
        %s266 = sand.u32 %s73, 1
        %s267 = smul.addr %s266, 8
        %s268 = scalar_lea.vmem [#allocation5], %s267
        %p269 = pneg %p86
        %p270 = pneg %p83
        %s271 = sand.u32 %s23, 1
        %s272 = scalar_lea.sflag [#allocation6], %s271
        %s273 = sand.u32 %s99, 1
        %s274 = smul.addr %s273, 2
        %s275 = scalar_lea.vmem [#allocation7], %s274
        %p276 = pneg %p112
        %p277 = pneg %p109
        %p278 = pneg %p140
        %p279 = pneg %p137
        %s280 = sand.u32 %s127, 1
        %s281 = scalar_lea.sflag [#allocation4], %s280
        %s282 = sand.u32 %s127, 1
        %s283 = smul.addr %s282, 16
        %s284 = scalar_lea.vmem [#allocation8], %s283
        %s285 = smul.u32 2, %s27
        %s286 = smul.u32 2, %s27
        %s287 = smul.u32 2, %s27
        %v291 = vld [vmem:[%s234] sm:$0xf]
        %v292 = vld [vmem:[%s234 + $0x4] sm:$0xf]
        %v293 = vunpack.c.l.bf16 %v291
        %v294 = vunpack.c.l.bf16 %v292
        %v295 = vld [vmem:[%s243] sm:$0xf]
        %v296 = vld [vmem:[%s243 + $0x4] sm:$0xf]
        %vm297 = vcmp.gt.bf16.partialorder %v295, 1056980736
        %vm298 = vcmp.gt.bf16.partialorder %v296, 1056980736
        %v299 = vld [vmem:[%s252] sm:$0x1]
        %v300 = vld [vmem:[%s252 + $0x1] sm:$0x1]
        %v301 = vand.u32 2147483647, %v293
        %v302 = vand.u32 2147483647, %v294
        %v303 = vsub.f32 0.0, %v301
        %v304 = vsub.f32 0.0, %v302
        %v305 = vmul.f32 %v303, 1.442695
        %v306 = vpow.pop %v305
        %v307 = vmul.f32 %v304, 1.442695
        %v308 = vpow.pop %v307
        %v309 = vmax.f32 %v293, 0.0
        %v310 = vmax.f32 %v294, 0.0
        %v311 = vadd.f32 %v306, 1.0
        %v312 = vlog2.pop %v311
        %v313 = vmul.f32 %v312, 0.6931472
        %v314 = vmul.f32 -0.5, %v306
        %v315 = vadd.f32 %v314, 1.0
        %v316 = vmul.f32 %v315, %v306
        %v317 = vand.u32 2147483647, %v306
        %vm318 = vcmp.lt.f32.partialorder %v317, 0.0004427343
        %v319 = vsel %vm318, %v316, %v313
        %v320 = vadd.f32 %v308, 1.0
        %v321 = vlog2.pop %v320
        %v322 = vmul.f32 %v321, 0.6931472
        %v323 = vmul.f32 -0.5, %v308
        %v324 = vadd.f32 %v323, 1.0
        %v325 = vmul.f32 %v324, %v308
        %v326 = vand.u32 2147483647, %v308
        %vm327 = vcmp.lt.f32.partialorder %v326, 0.0004427343
        %v328 = vsel %vm327, %v325, %v322
        %v329 = vadd.f32 %v309, %v319
        %v330 = vadd.f32 %v310, %v328
        %v331 = vsub.f32 %v329, %v293
        %v332 = vsub.f32 %v330, %v294
        %v333 = vadd.f32 %v306, 1.0
        %v334 = vadd.f32 %v308, 1.0
        %v335 = vrcp.pop %v333
        %v336 = vrcp.pop %v334
        %vm337 = vcmp.ge.f32.partialorder %v293, 0.0
        %vm338 = vcmp.ge.f32.partialorder %v294, 0.0
        %v339 = vmul.f32 %v306, %v335
        %v340 = vmul.f32 %v308, %v336
        %v341 = vsel %vm337, %v335, %v339
        %v342 = vsel %vm338, %v336, %v340
        %v343 = vlaneseq
        %v344 = vshrl.u32 %v343, 7
        %v345 = vsub.s32 0, %v344
        %v346 = vrot.slane %v300, %v345
        %v347 = vmul.f32 %v346, %v331
        %v348 = vmul.f32 %v346, %v332
        %v349 = vlaneseq
        %v350 = vshrl.u32 %v349, 7
        %v351 = vsub.s32 0, %v350
        %v352 = vrot.slane %v299, %v351
        %v353 = vmul.f32 %v352, %v329
        %v354 = vmul.f32 %v352, %v330
        %v355 = vmul.f32 %v341, 0.5
        %v356 = vmul.f32 %v342, 0.5
        %v357 = vadd.f32 %v353, %v355
        %v358 = vadd.f32 %v354, %v356
        %v359 = vsel %vm297, 65537, 0
        %v360 = vsel %vm298, 65537, 0
        %v361 = vunpack.c.l.b16 %v359
        %v362 = vunpack.c.l.b16 %v360
        %vm363 = vcmp.ne.s32.totalorder %v361, 0
        %vm364 = vcmp.ne.s32.totalorder %v362, 0
        %v365 = vsel %vm363, %v347, %v357
        %v366 = vsel %vm364, %v348, %v358
        %v367 = vadd.f32 %v365, 0.0
        %v368 = vadd.f32 %v366, 0.0
        %369 = vst [vmem:[%s284] sm:$0xff] %v367
        %370 = vst [vmem:[%s284 + $0x8] sm:$0xff] %v368
        %s371 = sand.u32 %s127, 1
        %s372 = scalar_lea.sflag [#allocation4], %s371
        %s373 = sand.u32 %s127, 1
        %s374 = smul.addr %s373, 16
        %s375 = scalar_lea.vmem [#allocation8], %s374
        // Predicated region
        $region45: #{tpu_custom_call.1} parent=31 // pred_check
          %p376 = pneg %p137
        $region46: #{tpu_custom_call.1} parent=31 // pred_check_branch
          %378 = sbr.rel (%p376) target = $region48
        $region47: #{tpu_custom_call.1} parent=31 // pred_region
          %s379 = smul.u32 2, %s27
          %s381 = ssub.s32 256, 256
          %382 = vsyncadd %s372, %s381
          %s383 = smul.addr %s379, 2
          %s384 = sadd.s32 %s28, %s383
          %s385 = smul.addr %s384, 128
          %s386 = scalar_lea.hbm %s3, %s385
          %s387 = sshll.u32 %s375, 4
          %s388 = int_to_ptr.vmem [resolvable:$true] %s387
          %393 = dma.vmem_to_hbm [thread:$0]  %s388, 256, %s386, %s372, 128, 256, 8
        $region48: #{tpu_custom_call.1} parent=31 // pred_fallthru
          _
      $region32: #{tpu_custom_call.1} parent=5 // pred_fallthru
        _
      %p394 = scmp.le.s32.totalorder 2, %s18
      // Predicated region
      $region49: #{tpu_custom_call.1} parent=5 // pred_check
        %p395 = pneg %p394
      $region50: #{tpu_custom_call.1} parent=5 // pred_check_branch
        %397 = sbr.rel (%p395) target = $region52
      $region51: #{tpu_custom_call.1} parent=5 // pred_region
        %s398 = ssub.s32 %s18, 2
        // Predicated region
        $region53: #{tpu_custom_call.1} parent=51 // pred_check
          %p399 = pneg %p143
        $region54: #{tpu_custom_call.1} parent=51 // pred_check_branch
          %401 = sbr.rel (%p399) target = $region56
        $region55: #{tpu_custom_call.1} parent=51 // pred_region
          %s402 = sand.u32 %s128, 1
          %s403 = scalar_lea.sflag [#allocation4], %s402
          %s404 = sand.u32 %s128, 1
          %s405 = smul.addr %s404, 16
          %s406 = scalar_lea.vmem [#allocation8], %s405
          %407 = dma.done %s403, 256
        $region56: #{tpu_custom_call.1} parent=51 // pred_fallthru
          _
      $region52: #{tpu_custom_call.1} parent=5 // pred_fallthru
        _
    $region6: #{tpu_custom_call.1} parent=1 // loop_footer
      %s22 = sadd.s32 1, %s18
    $region7: #{tpu_custom_call.1} parent=1 // loop_footer_branch
      %17 = sbr.rel target = $region3
    $region8: #{tpu_custom_call.1} parent=1 // loop_exit
      _
    %408 = vsyncpa [#allocation3], 1
    %s409 = scalar_lea.sflag [#allocation3], 1
    %410 = vsyncpa %s409, 1
    %411 = vsyncpa [#allocation6], 1
    %s412 = scalar_lea.sflag [#allocation6], 1
    %413 = vsyncpa %s412, 1
    %414 = vsyncpa [#allocation4], 1
    %s415 = scalar_lea.sflag [#allocation4], 1
    %416 = vsyncpa %s415, 1

</llo_original>
